<compile_context>
chip_gen: v6e
topology: v6e:2x2x1
jax: 0.10.0
libtpu: 0.0.40
codegen_flags: <defaults>
</compile_context>

<pallas_src>
import functools

import jax
import jax.numpy as jnp
from jax.experimental import pallas as pl
from jax.experimental.pallas import tpu as pltpu

_GRAY_COEFFS = (65.738 / 256.0, 129.057 / 256.0, 25.064 / 256.0)


def _to_gray_f32(ref, coeffs):
    """Grayscale (f32) of a (1, C, Hb, W) ref block -> (Hb, W)."""
    g = coeffs[0] * ref[0, 0].astype(jnp.float32)
    for c in range(1, ref.shape[1]):
        g = g + coeffs[c] * ref[0, c].astype(jnp.float32)
    return g


def _tile_grad(center_ref, top_ref, bot_ref, coeffs, halo_row,
               top_scale, bot_scale):
    """Gradient magnitude of one grayscale H-tile (TH, W) incl. halo rows."""
    g = _to_gray_f32(center_ref, coeffs)                            # (TH, W)
    # Row just above / below this tile; zeroed at the true image borders.
    g_top = _to_gray_f32(top_ref, coeffs)[halo_row:halo_row + 1, :] * top_scale
    g_bot = _to_gray_f32(bot_ref, coeffs)[0:1, :] * bot_scale
    TH, W = g.shape

    # Vertical diff x_v[i] = x[i+1] - x[i-1] (zero padding at image borders).
    if TH == 1:
        x_v = g_bot - g_top
    elif TH % 8 == 0:
        row = jax.lax.broadcasted_iota(jnp.int32, (TH, 1), 0)
        d = pltpu.roll(g, TH - 1, axis=0) - pltpu.roll(g, 1, axis=0)
        d = jnp.where(row == 0, g[1:2, :] - g_top, d)
        x_v = jnp.where(row == TH - 1, g_bot - g[TH - 2:TH - 1, :], d)
    else:  # only hit when H is not a multiple of 8 (single tile)
        x_v = (jnp.concatenate([g[1:, :], g_bot], axis=0)
               - jnp.concatenate([g_top, g[:-1, :]], axis=0))

    # Horizontal diff x_h[j] = x[j+1] - x[j-1].
    if W == 1:
        x_h = jnp.zeros_like(g)
    elif W % 128 == 0:
        col = jax.lax.broadcasted_iota(jnp.int32, (1, W), 1)
        d = pltpu.roll(g, W - 1, axis=1) - pltpu.roll(g, 1, axis=1)
        d = jnp.where(col == 0, g[:, 1:2], d)
        x_h = jnp.where(col == W - 1, -g[:, W - 2:W - 1], d)
    else:  # narrow (non lane-aligned) images: slice fallback
        zcol = jnp.zeros((TH, 1), dtype=jnp.float32)
        x_h = (jnp.concatenate([g[:, 1:], zcol], axis=1)
               - jnp.concatenate([zcol, g[:, :-1]], axis=1))

    return jnp.sqrt(x_v * x_v + x_h * x_h + 1e-6)


def _grad_l1_kernel(out_c, out_t, out_b, gt_c, gt_t, gt_b, part_ref, acc_ref,
                    *, coeffs, halo_row):
    t = pl.program_id(1)
    n_t = pl.num_programs(1)

    @pl.when(t == 0)
    def _():
        acc_ref[...] = jnp.zeros_like(acc_ref)

    top_scale = (t > 0).astype(jnp.float32)         # 0 at the true image top
    bot_scale = (t < n_t - 1).astype(jnp.float32)   # 0 at the true image bottom

    grad_out = _tile_grad(out_c, out_t, out_b, coeffs, halo_row,
                          top_scale, bot_scale)
    grad_gt = _tile_grad(gt_c, gt_t, gt_b, coeffs, halo_row,
                         top_scale, bot_scale)

    acc_ref[...] += jnp.abs(grad_out - grad_gt)

    @pl.when(t == n_t - 1)
    def _():
        # One lane-dense (1, W) partial per image; final reduce is in JAX.
        part_ref[...] = jnp.sum(acc_ref[...], axis=0, keepdims=True)[None]


def _pick_tile_h(H, C, W, itemsize):
    """Largest divisor of H that is a multiple of 8 and keeps an input block
    around ~2 MiB, so 2 inputs x 2 pipeline buffers fit comfortably in the
    scoped VMEM of every TPU generation (incl. v7x's 64 MiB)."""
    if H % 8 != 0:
        return H
    target_bytes = 2 * 1024 * 1024
    cap = max(8, (target_bytes // max(1, C * W * itemsize)) // 8 * 8)
    best = 8
    for th in range(8, H + 1, 8):
        if H % th == 0 and th <= cap:
            best = th
    return best


def grad_loss(output, gt_img, *, tile_h=None):
    """Pallas implementation of GradLoss.forward(output, gt_img)."""
    assert output.shape == gt_img.shape, (output.shape, gt_img.shape)
    assert output.dtype == gt_img.dtype, (output.dtype, gt_img.dtype)
    B, C, H, W = output.shape
    coeffs = _GRAY_COEFFS if C == 3 else (1.0,) * C

    itemsize = jnp.dtype(output.dtype).itemsize
    if tile_h is None:
        TH = _pick_tile_h(H, C, W, itemsize)
    else:
        TH = int(tile_h)
        if H % TH != 0 or (TH % 8 != 0 and TH != H):
            raise ValueError(f"tile_h={TH} must divide H={H} (multiple of 8)")
    n_t = H // TH

    # Halo windows: one 8-row (sublane-aligned) slab above / below each tile.
    HALO = 8 if H % 8 == 0 else H
    halo_row = HALO - 1
    if HALO == 8:
        thb = TH // 8
        hmax = H // 8 - 1
        top_map = lambda b, t: (b, 0, jnp.maximum(t * thb - 1, 0), 0)
        bot_map = lambda b, t: (b, 0, jnp.minimum((t + 1) * thb, hmax), 0)
    else:
        top_map = lambda b, t: (b, 0, 0, 0)
        bot_map = lambda b, t: (b, 0, 0, 0)

    center_spec = pl.BlockSpec((1, C, TH, W), lambda b, t: (b, 0, t, 0))
    top_spec = pl.BlockSpec((1, C, HALO, W), top_map)
    bot_spec = pl.BlockSpec((1, C, HALO, W), bot_map)

    # VMEM budget: double-buffered input blocks + halos + accumulator, x4 margin.
    blk = C * TH * W * itemsize
    halo_blk = C * HALO * W * itemsize
    est = 2 * (2 * blk + 4 * halo_blk) + TH * W * 4 + 4 * W * 4
    vmem_limit = int(min(max(4 * est, 32 * 1024 * 1024), 64 * 1024 * 1024))

    kernel = functools.partial(_grad_l1_kernel, coeffs=coeffs, halo_row=halo_row)

    partials = pl.pallas_call(
        kernel,
        out_shape=jax.ShapeDtypeStruct((B, 1, W), jnp.float32),
        grid=(B, n_t),
        in_specs=[center_spec, top_spec, bot_spec,
                  center_spec, top_spec, bot_spec],
        out_specs=pl.BlockSpec((1, 1, W), lambda b, t: (b, 0, 0)),
        scratch_shapes=[pltpu.VMEM((TH, W), jnp.float32)],
        compiler_params=pltpu.CompilerParams(
            dimension_semantics=("parallel", "arbitrary"),
            vmem_limit_bytes=vmem_limit,
        ),
    )(output, output, output, gt_img, gt_img, gt_img)

    # L1Loss(reduction='mean') over the (B, 1, H, W) gradient maps.
    return jnp.sum(partials) / jnp.float32(B * H * W)


def _ref_grad_loss(output, gt_img):
    """Pure-JAX reference matching the PyTorch semantics."""
    def gray(x):
        if x.shape[1] == 3:
            c = jnp.array(_GRAY_COEFFS, dtype=jnp.float32)
        else:
            c = jnp.ones((x.shape[1],), dtype=jnp.float32)
        return (x * c[None, :, None, None]).sum(axis=1, keepdims=True)

    def grad(x):
        xp = jnp.pad(x, ((0, 0), (0, 0), (1, 1), (1, 1)))
        x_v = xp[:, :, 2:, 1:-1] - xp[:, :, :-2, 1:-1]
        x_h = xp[:, :, 1:-1, 2:] - xp[:, :, 1:-1, :-2]
        return jnp.sqrt(x_v * x_v + x_h * x_h + 1e-6)

    go = grad(gray(output.astype(jnp.float32)))
    gg = grad(gray(gt_img.astype(jnp.float32)))
    return jnp.mean(jnp.abs(go - gg))


if __name__ == "__main__":
    key = jax.random.PRNGKey(0)
    k1, k2, k3, k4 = jax.random.split(key, 4)

    # Small f32 case (single H-tile, narrow W -> slice fallback for x_h).
    B, C, H, W = 2, 3, 16, 16
    out_a = jax.random.uniform(k1, (B, C, H, W), dtype=jnp.float32)
    gt_a = jax.random.uniform(k2, (B, C, H, W), dtype=jnp.float32)
    loss_a = jax.block_until_ready(grad_loss(out_a, gt_a))
    ref_a = jax.block_until_ready(_ref_grad_loss(out_a, gt_a))
    assert jnp.allclose(loss_a, ref_a, rtol=1e-5, atol=1e-6), (loss_a, ref_a)

    # bf16, multi-tile case: exercises native-dtype DMA, the H-halo handling
    # across tiles and both pltpu.roll fast paths (TH=8, W=128).
    B, C, H, W = 2, 3, 32, 128
    out_b = jax.random.uniform(k3, (B, C, H, W), dtype=jnp.float32).astype(jnp.bfloat16)
    gt_b = jax.random.uniform(k4, (B, C, H, W), dtype=jnp.float32).astype(jnp.bfloat16)
    loss_b = jax.block_until_ready(grad_loss(out_b, gt_b, tile_h=8))
    ref_b = jax.block_until_ready(_ref_grad_loss(out_b, gt_b))
    assert jnp.allclose(loss_b, ref_b, rtol=1e-4, atol=1e-5), (loss_b, ref_b)

    print("KERNEL_OK")
</pallas_src>

<mosaic_0001>
module attributes {stable_mosaic.version = 11 : i64} {
  func.func @_grad_l1_kernel(%arg0: i32, %arg1: i32, %arg2: memref<1x3x16x16xf32, #tpu.memory_space<vmem>>, %arg3: memref<1x3x8x16xf32, #tpu.memory_space<vmem>>, %arg4: memref<1x3x8x16xf32, #tpu.memory_space<vmem>>, %arg5: memref<1x3x16x16xf32, #tpu.memory_space<vmem>>, %arg6: memref<1x3x8x16xf32, #tpu.memory_space<vmem>>, %arg7: memref<1x3x8x16xf32, #tpu.memory_space<vmem>>, %arg8: memref<1x1x16xf32, #tpu.memory_space<vmem>>, %arg9: memref<16x16xf32, #tpu.memory_space<vmem>>) attributes {dimension_semantics = [#tpu.dimension_semantics<parallel>, #tpu.dimension_semantics<arbitrary>], iteration_bounds = array<i64: 2, 1>, scalar_prefetch = 0 : i64, scratch_operands = 1 : i64, tpu.core_type = #tpu.core_type<tc>, window_params = [{transform_indices = @transform_0, window_bounds = array<i64: 1, 3, 16, 16>}, {transform_indices = @transform_1, window_bounds = array<i64: 1, 3, 8, 16>}, {transform_indices = @transform_2, window_bounds = array<i64: 1, 3, 8, 16>}, {transform_indices = @transform_3, window_bounds = array<i64: 1, 3, 16, 16>}, {transform_indices = @transform_4, window_bounds = array<i64: 1, 3, 8, 16>}, {transform_indices = @transform_5, window_bounds = array<i64: 1, 3, 8, 16>}, {transform_indices = @transform_6, window_bounds = array<i64: 1, 1, 16>}]} {
    %c0_i32 = arith.constant 0 : i32
    %0 = arith.cmpi eq, %arg1, %c0_i32 : i32
    %1 = arith.extui %0 : i1 to i32
    %c0_i32_0 = arith.constant 0 : i32
    %2 = arith.cmpi ne, %1, %c0_i32_0 : i32
    scf.if %2 {
      %cst_105 = arith.constant 0.000000e+00 : f32
      %181 = vector.broadcast %cst_105 : f32 to vector<16x16xf32>
      %c0_106 = arith.constant 0 : index
      %c0_107 = arith.constant 0 : index
      %182 = vector.load %arg9[%c0_106, %c0_107] : memref<16x16xf32, #tpu.memory_space<vmem>>, vector<16x16xf32>
      tpu.vector_store %arg9[%c0_106, %c0_107], %181 {strides = array<i32>} : memref<16x16xf32, #tpu.memory_space<vmem>>, vector<16x16xf32>,
    } else {
    }
    %c0_i32_1 = arith.constant 0 : i32
    %3 = arith.cmpi sgt, %arg1, %c0_i32_1 : i32
    %4 = arith.extui %3 : i1 to i32
    %5 = arith.sitofp %4 : i32 to f32
    %c0_i32_2 = arith.constant 0 : i32
    %6 = arith.cmpi slt, %arg1, %c0_i32_2 : i32
    %7 = arith.extui %6 : i1 to i32
    %8 = arith.sitofp %7 : i32 to f32
    %c0 = arith.constant 0 : index
    %c0_3 = arith.constant 0 : index
    %c0_4 = arith.constant 0 : index
    %c0_5 = arith.constant 0 : index
    %9 = vector.load %arg2[%c0, %c0_3, %c0_4, %c0_5] : memref<1x3x16x16xf32, #tpu.memory_space<vmem>>, vector<1x1x16x16xf32>
    %10 = vector.shape_cast %9 : vector<1x1x16x16xf32> to vector<16x16xf32>
    %cst = arith.constant 0.256789058 : f32
    %11 = vector.broadcast %cst : f32 to vector<16x16xf32>
    %12 = arith.mulf %11, %10 : vector<16x16xf32>
    %c0_6 = arith.constant 0 : index
    %c1 = arith.constant 1 : index
    %c0_7 = arith.constant 0 : index
    %c0_8 = arith.constant 0 : index
    %13 = vector.load %arg2[%c0_6, %c1, %c0_7, %c0_8] : memref<1x3x16x16xf32, #tpu.memory_space<vmem>>, vector<1x1x16x16xf32>
    %14 = vector.shape_cast %13 : vector<1x1x16x16xf32> to vector<16x16xf32>
    %cst_9 = arith.constant 0.504128933 : f32
    %15 = vector.broadcast %cst_9 : f32 to vector<16x16xf32>
    %16 = arith.mulf %15, %14 : vector<16x16xf32>
    %17 = arith.addf %12, %16 : vector<16x16xf32>
    %c0_10 = arith.constant 0 : index
    %c2 = arith.constant 2 : index
    %c0_11 = arith.constant 0 : index
    %c0_12 = arith.constant 0 : index
    %18 = vector.load %arg2[%c0_10, %c2, %c0_11, %c0_12] : memref<1x3x16x16xf32, #tpu.memory_space<vmem>>, vector<1x1x16x16xf32>
    %19 = vector.shape_cast %18 : vector<1x1x16x16xf32> to vector<16x16xf32>
    %cst_13 = arith.constant 0.0979062467 : f32
    %20 = vector.broadcast %cst_13 : f32 to vector<16x16xf32>
    %21 = arith.mulf %20, %19 : vector<16x16xf32>
    %22 = arith.addf %17, %21 : vector<16x16xf32>
    %c0_14 = arith.constant 0 : index
    %c0_15 = arith.constant 0 : index
    %c0_16 = arith.constant 0 : index
    %c0_17 = arith.constant 0 : index
    %23 = vector.load %arg3[%c0_14, %c0_15, %c0_16, %c0_17] : memref<1x3x8x16xf32, #tpu.memory_space<vmem>>, vector<1x1x8x16xf32>
    %24 = vector.shape_cast %23 : vector<1x1x8x16xf32> to vector<8x16xf32>
    %cst_18 = arith.constant 0.256789058 : f32
    %25 = vector.broadcast %cst_18 : f32 to vector<8x16xf32>
    %26 = arith.mulf %25, %24 : vector<8x16xf32>
    %c0_19 = arith.constant 0 : index
    %c1_20 = arith.constant 1 : index
    %c0_21 = arith.constant 0 : index
    %c0_22 = arith.constant 0 : index
    %27 = vector.load %arg3[%c0_19, %c1_20, %c0_21, %c0_22] : memref<1x3x8x16xf32, #tpu.memory_space<vmem>>, vector<1x1x8x16xf32>
    %28 = vector.shape_cast %27 : vector<1x1x8x16xf32> to vector<8x16xf32>
    %cst_23 = arith.constant 0.504128933 : f32
    %29 = vector.broadcast %cst_23 : f32 to vector<8x16xf32>
    %30 = arith.mulf %29, %28 : vector<8x16xf32>
    %31 = arith.addf %26, %30 : vector<8x16xf32>
    %c0_24 = arith.constant 0 : index
    %c2_25 = arith.constant 2 : index
    %c0_26 = arith.constant 0 : index
    %c0_27 = arith.constant 0 : index
    %32 = vector.load %arg3[%c0_24, %c2_25, %c0_26, %c0_27] : memref<1x3x8x16xf32, #tpu.memory_space<vmem>>, vector<1x1x8x16xf32>
    %33 = vector.shape_cast %32 : vector<1x1x8x16xf32> to vector<8x16xf32>
    %cst_28 = arith.constant 0.0979062467 : f32
    %34 = vector.broadcast %cst_28 : f32 to vector<8x16xf32>
    %35 = arith.mulf %34, %33 : vector<8x16xf32>
    %36 = arith.addf %31, %35 : vector<8x16xf32>
    %37 = vector.extract_strided_slice %36 {offsets = [7, 0], sizes = [1, 16], strides = [1, 1]} : vector<8x16xf32> to vector<1x16xf32>
    %38 = vector.broadcast %5 : f32 to vector<1x16xf32>
    %39 = arith.mulf %37, %38 : vector<1x16xf32>
    %c0_29 = arith.constant 0 : index
    %c0_30 = arith.constant 0 : index
    %c0_31 = arith.constant 0 : index
    %c0_32 = arith.constant 0 : index
    %40 = vector.load %arg4[%c0_29, %c0_30, %c0_31, %c0_32] : memref<1x3x8x16xf32, #tpu.memory_space<vmem>>, vector<1x1x8x16xf32>
    %41 = vector.shape_cast %40 : vector<1x1x8x16xf32> to vector<8x16xf32>
    %cst_33 = arith.constant 0.256789058 : f32
    %42 = vector.broadcast %cst_33 : f32 to vector<8x16xf32>
    %43 = arith.mulf %42, %41 : vector<8x16xf32>
    %c0_34 = arith.constant 0 : index
    %c1_35 = arith.constant 1 : index
    %c0_36 = arith.constant 0 : index
    %c0_37 = arith.constant 0 : index
    %44 = vector.load %arg4[%c0_34, %c1_35, %c0_36, %c0_37] : memref<1x3x8x16xf32, #tpu.memory_space<vmem>>, vector<1x1x8x16xf32>
    %45 = vector.shape_cast %44 : vector<1x1x8x16xf32> to vector<8x16xf32>
    %cst_38 = arith.constant 0.504128933 : f32
    %46 = vector.broadcast %cst_38 : f32 to vector<8x16xf32>
    %47 = arith.mulf %46, %45 : vector<8x16xf32>
    %48 = arith.addf %43, %47 : vector<8x16xf32>
    %c0_39 = arith.constant 0 : index
    %c2_40 = arith.constant 2 : index
    %c0_41 = arith.constant 0 : index
    %c0_42 = arith.constant 0 : index
    %49 = vector.load %arg4[%c0_39, %c2_40, %c0_41, %c0_42] : memref<1x3x8x16xf32, #tpu.memory_space<vmem>>, vector<1x1x8x16xf32>
    %50 = vector.shape_cast %49 : vector<1x1x8x16xf32> to vector<8x16xf32>
    %cst_43 = arith.constant 0.0979062467 : f32
    %51 = vector.broadcast %cst_43 : f32 to vector<8x16xf32>
    %52 = arith.mulf %51, %50 : vector<8x16xf32>
    %53 = arith.addf %48, %52 : vector<8x16xf32>
    %54 = vector.extract_strided_slice %53 {offsets = [0, 0], sizes = [1, 16], strides = [1, 1]} : vector<8x16xf32> to vector<1x16xf32>
    %55 = vector.broadcast %8 : f32 to vector<1x16xf32>
    %56 = arith.mulf %54, %55 : vector<1x16xf32>
    %57 = tpu.iota {dimensions = array<i32: 0>} : vector<16x1xi32>
    %c15_i32 = arith.constant 15 : i32
    %58 = tpu.dynamic_rotate %22 by %c15_i32 dim 0 : vector<16x16xf32>, i32 -> vector<16x16xf32>
    %c1_i32 = arith.constant 1 : i32
    %59 = tpu.dynamic_rotate %22 by %c1_i32 dim 0 : vector<16x16xf32>, i32 -> vector<16x16xf32>
    %60 = arith.subf %58, %59 : vector<16x16xf32>
    %c0_i32_44 = arith.constant 0 : i32
    %61 = vector.broadcast %c0_i32_44 : i32 to vector<16x1xi32>
    %62 = arith.cmpi eq, %57, %61 : vector<16x1xi32>
    %63 = vector.extract_strided_slice %22 {offsets = [1, 0], sizes = [1, 16], strides = [1, 1]} : vector<16x16xf32> to vector<1x16xf32>
    %64 = arith.subf %63, %39 : vector<1x16xf32>
    %65 = vector.shape_cast %62 : vector<16x1xi1> to vector<16x1xi1>
    %66 = vector.broadcast %65 : vector<16x1xi1> to vector<16x16xi1>
    %67 = vector.shape_cast %64 : vector<1x16xf32> to vector<1x16xf32>
    %68 = vector.broadcast %67 : vector<1x16xf32> to vector<16x16xf32>
    %69 = arith.select %66, %68, %60 : vector<16x16xi1>, vector<16x16xf32>
    %c15_i32_45 = arith.constant 15 : i32
    %70 = vector.broadcast %c15_i32_45 : i32 to vector<16x1xi32>
    %71 = arith.cmpi eq, %57, %70 : vector<16x1xi32>
    %72 = vector.extract_strided_slice %22 {offsets = [14, 0], sizes = [1, 16], strides = [1, 1]} : vector<16x16xf32> to vector<1x16xf32>
    %73 = arith.subf %56, %72 : vector<1x16xf32>
    %74 = vector.shape_cast %71 : vector<16x1xi1> to vector<16x1xi1>
    %75 = vector.broadcast %74 : vector<16x1xi1> to vector<16x16xi1>
    %76 = vector.shape_cast %73 : vector<1x16xf32> to vector<1x16xf32>
    %77 = vector.broadcast %76 : vector<1x16xf32> to vector<16x16xf32>
    %78 = arith.select %75, %77, %69 : vector<16x16xi1>, vector<16x16xf32>
    %cst_46 = arith.constant 0.000000e+00 : f32
    %79 = vector.broadcast %cst_46 : f32 to vector<16x1xf32>
    %80 = vector.extract_strided_slice %22 {offsets = [0, 1], sizes = [16, 15], strides = [1, 1]} : vector<16x16xf32> to vector<16x15xf32>
    %81 = tpu.concatenate %80, %79 in 1 : vector<16x15xf32>, vector<16x1xf32> -> vector<16x16xf32>
    %82 = vector.extract_strided_slice %22 {offsets = [0, 0], sizes = [16, 15], strides = [1, 1]} : vector<16x16xf32> to vector<16x15xf32>
    %83 = tpu.concatenate %79, %82 in 1 : vector<16x1xf32>, vector<16x15xf32> -> vector<16x16xf32>
    %84 = arith.subf %81, %83 : vector<16x16xf32>
    %85 = arith.mulf %78, %78 : vector<16x16xf32>
    %86 = arith.mulf %84, %84 : vector<16x16xf32>
    %87 = arith.addf %85, %86 : vector<16x16xf32>
    %cst_47 = arith.constant 9.99999997E-7 : f32
    %88 = vector.broadcast %cst_47 : f32 to vector<16x16xf32>
    %89 = arith.addf %87, %88 : vector<16x16xf32>
    %90 = math.sqrt %89 : vector<16x16xf32>
    %c0_48 = arith.constant 0 : index
    %c0_49 = arith.constant 0 : index
    %c0_50 = arith.constant 0 : index
    %c0_51 = arith.constant 0 : index
    %91 = vector.load %arg5[%c0_48, %c0_49, %c0_50, %c0_51] : memref<1x3x16x16xf32, #tpu.memory_space<vmem>>, vector<1x1x16x16xf32>
    %92 = vector.shape_cast %91 : vector<1x1x16x16xf32> to vector<16x16xf32>
    %cst_52 = arith.constant 0.256789058 : f32
    %93 = vector.broadcast %cst_52 : f32 to vector<16x16xf32>
    %94 = arith.mulf %93, %92 : vector<16x16xf32>
    %c0_53 = arith.constant 0 : index
    %c1_54 = arith.constant 1 : index
    %c0_55 = arith.constant 0 : index
    %c0_56 = arith.constant 0 : index
    %95 = vector.load %arg5[%c0_53, %c1_54, %c0_55, %c0_56] : memref<1x3x16x16xf32, #tpu.memory_space<vmem>>, vector<1x1x16x16xf32>
    %96 = vector.shape_cast %95 : vector<1x1x16x16xf32> to vector<16x16xf32>
    %cst_57 = arith.constant 0.504128933 : f32
    %97 = vector.broadcast %cst_57 : f32 to vector<16x16xf32>
    %98 = arith.mulf %97, %96 : vector<16x16xf32>
    %99 = arith.addf %94, %98 : vector<16x16xf32>
    %c0_58 = arith.constant 0 : index
    %c2_59 = arith.constant 2 : index
    %c0_60 = arith.constant 0 : index
    %c0_61 = arith.constant 0 : index
    %100 = vector.load %arg5[%c0_58, %c2_59, %c0_60, %c0_61] : memref<1x3x16x16xf32, #tpu.memory_space<vmem>>, vector<1x1x16x16xf32>
    %101 = vector.shape_cast %100 : vector<1x1x16x16xf32> to vector<16x16xf32>
    %cst_62 = arith.constant 0.0979062467 : f32
    %102 = vector.broadcast %cst_62 : f32 to vector<16x16xf32>
    %103 = arith.mulf %102, %101 : vector<16x16xf32>
    %104 = arith.addf %99, %103 : vector<16x16xf32>
    %c0_63 = arith.constant 0 : index
    %c0_64 = arith.constant 0 : index
    %c0_65 = arith.constant 0 : index
    %c0_66 = arith.constant 0 : index
    %105 = vector.load %arg6[%c0_63, %c0_64, %c0_65, %c0_66] : memref<1x3x8x16xf32, #tpu.memory_space<vmem>>, vector<1x1x8x16xf32>
    %106 = vector.shape_cast %105 : vector<1x1x8x16xf32> to vector<8x16xf32>
    %cst_67 = arith.constant 0.256789058 : f32
    %107 = vector.broadcast %cst_67 : f32 to vector<8x16xf32>
    %108 = arith.mulf %107, %106 : vector<8x16xf32>
    %c0_68 = arith.constant 0 : index
    %c1_69 = arith.constant 1 : index
    %c0_70 = arith.constant 0 : index
    %c0_71 = arith.constant 0 : index
    %109 = vector.load %arg6[%c0_68, %c1_69, %c0_70, %c0_71] : memref<1x3x8x16xf32, #tpu.memory_space<vmem>>, vector<1x1x8x16xf32>
    %110 = vector.shape_cast %109 : vector<1x1x8x16xf32> to vector<8x16xf32>
    %cst_72 = arith.constant 0.504128933 : f32
    %111 = vector.broadcast %cst_72 : f32 to vector<8x16xf32>
    %112 = arith.mulf %111, %110 : vector<8x16xf32>
    %113 = arith.addf %108, %112 : vector<8x16xf32>
    %c0_73 = arith.constant 0 : index
    %c2_74 = arith.constant 2 : index
    %c0_75 = arith.constant 0 : index
    %c0_76 = arith.constant 0 : index
    %114 = vector.load %arg6[%c0_73, %c2_74, %c0_75, %c0_76] : memref<1x3x8x16xf32, #tpu.memory_space<vmem>>, vector<1x1x8x16xf32>
    %115 = vector.shape_cast %114 : vector<1x1x8x16xf32> to vector<8x16xf32>
    %cst_77 = arith.constant 0.0979062467 : f32
    %116 = vector.broadcast %cst_77 : f32 to vector<8x16xf32>
    %117 = arith.mulf %116, %115 : vector<8x16xf32>
    %118 = arith.addf %113, %117 : vector<8x16xf32>
    %119 = vector.extract_strided_slice %118 {offsets = [7, 0], sizes = [1, 16], strides = [1, 1]} : vector<8x16xf32> to vector<1x16xf32>
    %120 = vector.broadcast %5 : f32 to vector<1x16xf32>
    %121 = arith.mulf %119, %120 : vector<1x16xf32>
    %c0_78 = arith.constant 0 : index
    %c0_79 = arith.constant 0 : index
    %c0_80 = arith.constant 0 : index
    %c0_81 = arith.constant 0 : index
    %122 = vector.load %arg7[%c0_78, %c0_79, %c0_80, %c0_81] : memref<1x3x8x16xf32, #tpu.memory_space<vmem>>, vector<1x1x8x16xf32>
    %123 = vector.shape_cast %122 : vector<1x1x8x16xf32> to vector<8x16xf32>
    %cst_82 = arith.constant 0.256789058 : f32
    %124 = vector.broadcast %cst_82 : f32 to vector<8x16xf32>
    %125 = arith.mulf %124, %123 : vector<8x16xf32>
    %c0_83 = arith.constant 0 : index
    %c1_84 = arith.constant 1 : index
    %c0_85 = arith.constant 0 : index
    %c0_86 = arith.constant 0 : index
    %126 = vector.load %arg7[%c0_83, %c1_84, %c0_85, %c0_86] : memref<1x3x8x16xf32, #tpu.memory_space<vmem>>, vector<1x1x8x16xf32>
    %127 = vector.shape_cast %126 : vector<1x1x8x16xf32> to vector<8x16xf32>
    %cst_87 = arith.constant 0.504128933 : f32
    %128 = vector.broadcast %cst_87 : f32 to vector<8x16xf32>
    %129 = arith.mulf %128, %127 : vector<8x16xf32>
    %130 = arith.addf %125, %129 : vector<8x16xf32>
    %c0_88 = arith.constant 0 : index
    %c2_89 = arith.constant 2 : index
    %c0_90 = arith.constant 0 : index
    %c0_91 = arith.constant 0 : index
    %131 = vector.load %arg7[%c0_88, %c2_89, %c0_90, %c0_91] : memref<1x3x8x16xf32, #tpu.memory_space<vmem>>, vector<1x1x8x16xf32>
    %132 = vector.shape_cast %131 : vector<1x1x8x16xf32> to vector<8x16xf32>
    %cst_92 = arith.constant 0.0979062467 : f32
    %133 = vector.broadcast %cst_92 : f32 to vector<8x16xf32>
    %134 = arith.mulf %133, %132 : vector<8x16xf32>
    %135 = arith.addf %130, %134 : vector<8x16xf32>
    %136 = vector.extract_strided_slice %135 {offsets = [0, 0], sizes = [1, 16], strides = [1, 1]} : vector<8x16xf32> to vector<1x16xf32>
    %137 = vector.broadcast %8 : f32 to vector<1x16xf32>
    %138 = arith.mulf %136, %137 : vector<1x16xf32>
    %139 = tpu.iota {dimensions = array<i32: 0>} : vector<16x1xi32>
    %c15_i32_93 = arith.constant 15 : i32
    %140 = tpu.dynamic_rotate %104 by %c15_i32_93 dim 0 : vector<16x16xf32>, i32 -> vector<16x16xf32>
    %c1_i32_94 = arith.constant 1 : i32
    %141 = tpu.dynamic_rotate %104 by %c1_i32_94 dim 0 : vector<16x16xf32>, i32 -> vector<16x16xf32>
    %142 = arith.subf %140, %141 : vector<16x16xf32>
    %c0_i32_95 = arith.constant 0 : i32
    %143 = vector.broadcast %c0_i32_95 : i32 to vector<16x1xi32>
    %144 = arith.cmpi eq, %139, %143 : vector<16x1xi32>
    %145 = vector.extract_strided_slice %104 {offsets = [1, 0], sizes = [1, 16], strides = [1, 1]} : vector<16x16xf32> to vector<1x16xf32>
    %146 = arith.subf %145, %121 : vector<1x16xf32>
    %147 = vector.shape_cast %144 : vector<16x1xi1> to vector<16x1xi1>
    %148 = vector.broadcast %147 : vector<16x1xi1> to vector<16x16xi1>
    %149 = vector.shape_cast %146 : vector<1x16xf32> to vector<1x16xf32>
    %150 = vector.broadcast %149 : vector<1x16xf32> to vector<16x16xf32>
    %151 = arith.select %148, %150, %142 : vector<16x16xi1>, vector<16x16xf32>
    %c15_i32_96 = arith.constant 15 : i32
    %152 = vector.broadcast %c15_i32_96 : i32 to vector<16x1xi32>
    %153 = arith.cmpi eq, %139, %152 : vector<16x1xi32>
    %154 = vector.extract_strided_slice %104 {offsets = [14, 0], sizes = [1, 16], strides = [1, 1]} : vector<16x16xf32> to vector<1x16xf32>
    %155 = arith.subf %138, %154 : vector<1x16xf32>
    %156 = vector.shape_cast %153 : vector<16x1xi1> to vector<16x1xi1>
    %157 = vector.broadcast %156 : vector<16x1xi1> to vector<16x16xi1>
    %158 = vector.shape_cast %155 : vector<1x16xf32> to vector<1x16xf32>
    %159 = vector.broadcast %158 : vector<1x16xf32> to vector<16x16xf32>
    %160 = arith.select %157, %159, %151 : vector<16x16xi1>, vector<16x16xf32>
    %cst_97 = arith.constant 0.000000e+00 : f32
    %161 = vector.broadcast %cst_97 : f32 to vector<16x1xf32>
    %162 = vector.extract_strided_slice %104 {offsets = [0, 1], sizes = [16, 15], strides = [1, 1]} : vector<16x16xf32> to vector<16x15xf32>
    %163 = tpu.concatenate %162, %161 in 1 : vector<16x15xf32>, vector<16x1xf32> -> vector<16x16xf32>
    %164 = vector.extract_strided_slice %104 {offsets = [0, 0], sizes = [16, 15], strides = [1, 1]} : vector<16x16xf32> to vector<16x15xf32>
    %165 = tpu.concatenate %161, %164 in 1 : vector<16x1xf32>, vector<16x15xf32> -> vector<16x16xf32>
    %166 = arith.subf %163, %165 : vector<16x16xf32>
    %167 = arith.mulf %160, %160 : vector<16x16xf32>
    %168 = arith.mulf %166, %166 : vector<16x16xf32>
    %169 = arith.addf %167, %168 : vector<16x16xf32>
    %cst_98 = arith.constant 9.99999997E-7 : f32
    %170 = vector.broadcast %cst_98 : f32 to vector<16x16xf32>
    %171 = arith.addf %169, %170 : vector<16x16xf32>
    %172 = math.sqrt %171 : vector<16x16xf32>
    %c0_99 = arith.constant 0 : index
    %c0_100 = arith.constant 0 : index
    %173 = vector.load %arg9[%c0_99, %c0_100] : memref<16x16xf32, #tpu.memory_space<vmem>>, vector<16x16xf32>
    %174 = arith.subf %90, %172 : vector<16x16xf32>
    %175 = math.absf %174 : vector<16x16xf32>
    %176 = arith.addf %173, %175 : vector<16x16xf32>
    %c0_101 = arith.constant 0 : index
    %c0_102 = arith.constant 0 : index
    %177 = vector.load %arg9[%c0_101, %c0_102] : memref<16x16xf32, #tpu.memory_space<vmem>>, vector<16x16xf32>
    tpu.vector_store %arg9[%c0_101, %c0_102], %176 {strides = array<i32>} : memref<16x16xf32, #tpu.memory_space<vmem>>, vector<16x16xf32>,
    %c0_i32_103 = arith.constant 0 : i32
    %178 = arith.cmpi eq, %arg1, %c0_i32_103 : i32
    %179 = arith.extui %178 : i1 to i32
    %c0_i32_104 = arith.constant 0 : i32
    %180 = arith.cmpi ne, %179, %c0_i32_104 : i32
    scf.if %180 {
      %c0_105 = arith.constant 0 : index
      %c0_106 = arith.constant 0 : index
      %181 = vector.load %arg9[%c0_105, %c0_106] : memref<16x16xf32, #tpu.memory_space<vmem>>, vector<16x16xf32>
      %cst_107 = arith.constant dense<0.000000e+00> : vector<16xf32>
      %182 = vector.multi_reduction <add>, %181, %cst_107 [0] : vector<16x16xf32> to vector<16xf32>
      %183 = vector.shape_cast %182 : vector<16xf32> to vector<1x16xf32>
      %184 = vector.shape_cast %183 : vector<1x16xf32> to vector<1x1x16xf32>
      %c0_108 = arith.constant 0 : index
      %c0_109 = arith.constant 0 : index
      %c0_110 = arith.constant 0 : index
      %185 = vector.load %arg8[%c0_108, %c0_109, %c0_110] : memref<1x1x16xf32, #tpu.memory_space<vmem>>, vector<1x1x16xf32>
      tpu.vector_store %arg8[%c0_108, %c0_109, %c0_110], %184 {strides = array<i32>} : memref<1x1x16xf32, #tpu.memory_space<vmem>>, vector<1x1x16xf32>,
    } else {
    }
    return
  }
  func.func @transform_0(%arg0: i32, %arg1: i32) -> (i32, i32, i32, i32) {
    %c0_i32 = arith.constant 0 : i32
    %c0_i32_0 = arith.constant 0 : i32
    %c0_i32_1 = arith.constant 0 : i32
    return %arg0, %c0_i32, %arg1, %c0_i32_0 : i32, i32, i32, i32
  }
  func.func @transform_1(%arg0: i32, %arg1: i32) -> (i32, i32, i32, i32) {
    %c2_i32 = arith.constant 2 : i32
    %0 = arith.muli %arg1, %c2_i32 : i32
    %c1_i32 = arith.constant 1 : i32
    %1 = arith.subi %0, %c1_i32 : i32
    %c0_i32 = arith.constant 0 : i32
    %2 = arith.maxsi %1, %c0_i32 : i32
    %c0_i32_0 = arith.constant 0 : i32
    %c0_i32_1 = arith.constant 0 : i32
    %c0_i32_2 = arith.constant 0 : i32
    return %arg0, %c0_i32_0, %2, %c0_i32_1 : i32, i32, i32, i32
  }
  func.func @transform_2(%arg0: i32, %arg1: i32) -> (i32, i32, i32, i32) {
    %c1_i32 = arith.constant 1 : i32
    %0 = arith.addi %arg1, %c1_i32 : i32
    %c2_i32 = arith.constant 2 : i32
    %1 = arith.muli %0, %c2_i32 : i32
    %c1_i32_0 = arith.constant 1 : i32
    %2 = arith.minsi %1, %c1_i32_0 : i32
    %c0_i32 = arith.constant 0 : i32
    %c0_i32_1 = arith.constant 0 : i32
    %c0_i32_2 = arith.constant 0 : i32
    return %arg0, %c0_i32, %2, %c0_i32_1 : i32, i32, i32, i32
  }
  func.func @transform_3(%arg0: i32, %arg1: i32) -> (i32, i32, i32, i32) {
    %c0_i32 = arith.constant 0 : i32
    %c0_i32_0 = arith.constant 0 : i32
    %c0_i32_1 = arith.constant 0 : i32
    return %arg0, %c0_i32, %arg1, %c0_i32_0 : i32, i32, i32, i32
  }
  func.func @transform_4(%arg0: i32, %arg1: i32) -> (i32, i32, i32, i32) {
    %c2_i32 = arith.constant 2 : i32
    %0 = arith.muli %arg1, %c2_i32 : i32
    %c1_i32 = arith.constant 1 : i32
    %1 = arith.subi %0, %c1_i32 : i32
    %c0_i32 = arith.constant 0 : i32
    %2 = arith.maxsi %1, %c0_i32 : i32
    %c0_i32_0 = arith.constant 0 : i32
    %c0_i32_1 = arith.constant 0 : i32
    %c0_i32_2 = arith.constant 0 : i32
    return %arg0, %c0_i32_0, %2, %c0_i32_1 : i32, i32, i32, i32
  }
  func.func @transform_5(%arg0: i32, %arg1: i32) -> (i32, i32, i32, i32) {
    %c1_i32 = arith.constant 1 : i32
    %0 = arith.addi %arg1, %c1_i32 : i32
    %c2_i32 = arith.constant 2 : i32
    %1 = arith.muli %0, %c2_i32 : i32
    %c1_i32_0 = arith.constant 1 : i32
    %2 = arith.minsi %1, %c1_i32_0 : i32
    %c0_i32 = arith.constant 0 : i32
    %c0_i32_1 = arith.constant 0 : i32
    %c0_i32_2 = arith.constant 0 : i32
    return %arg0, %c0_i32, %2, %c0_i32_1 : i32, i32, i32, i32
  }
  func.func @transform_6(%arg0: i32, %arg1: i32) -> (i32, i32, i32) {
    %c0_i32 = arith.constant 0 : i32
    %c0_i32_0 = arith.constant 0 : i32
    %c0_i32_1 = arith.constant 0 : i32
    return %arg0, %c0_i32, %c0_i32_0 : i32, i32, i32
  }
}

</mosaic_0001>

<llo_original>
// kernel: tpu_custom_call.1
$region0: #{tpu_custom_call.1}
  #allocation0 [shape = 'u32[]', space=smem, size = 0x4, offset = 0x4, fixed_abs, tag = 'smem constant byte address 0x4 - core index']
  #allocation1 [shape = 'u32[144,128]{1,0:T(1,128)}', space=vmem, size = 0x12000, scoped, tag = 'internal scratch']
  #allocation2 [shape = 'f32[16,16]{1,0:T(8,128)}', space=vmem, size = 0x2000, scoped, tag = 'scratch operand']
  %s0 = inlined_call_operand.hbm [shape: f32[2,3,16,16], index: 0, kind: input, shape index: {}]
  %s1 = inlined_call_operand.hbm [shape: f32[2,3,16,16], index: 1, kind: input, shape index: {}]
  %s2 = inlined_call_operand.hbm [shape: f32[2,3,16,16], index: 2, kind: input, shape index: {}]
  %s3 = inlined_call_operand.hbm [shape: f32[2,3,16,16], index: 3, kind: input, shape index: {}]
  %s4 = inlined_call_operand.hbm [shape: f32[2,3,16,16], index: 4, kind: input, shape index: {}]
  %s5 = inlined_call_operand.hbm [shape: f32[2,3,16,16], index: 5, kind: input, shape index: {}]
  %s6 = inlined_call_operand.hbm [shape: f32[2,1,16], index: 6, kind: output, shape index: {}]
  %s7 = sld [smem:[#allocation0]]
  $region89: #{tpu_custom_call.1} parent=0
    _
  %s9 = ssub.s32 1, %s7
  %s10 = scalar_select 0, %s9, %s7
  $region1: #{tpu_custom_call.1} parent=0
    #allocation3 [shape = 'u8[49152]{0}', space=vmem, size = 0xc000, scoped, tag = 'input window, operand 0']
    #allocation4 [shape = 's32[2]{0}', space=sflag, size = 0x8, scoped, tag = 'scoped memory for tpu_custom_call.1']
    #allocation5 [shape = 's32[2]{0}', space=sflag, size = 0x8, scoped, tag = 'scoped memory for tpu_custom_call.1']
    #allocation6 [shape = 'u8[24576]{0}', space=vmem, size = 0x6000, scoped, tag = 'input window, operand 1']
    #allocation7 [shape = 's32[2]{0}', space=sflag, size = 0x8, scoped, tag = 'scoped memory for tpu_custom_call.1']
    #allocation8 [shape = 'u8[24576]{0}', space=vmem, size = 0x6000, scoped, tag = 'input window, operand 2']
    #allocation9 [shape = 'u8[49152]{0}', space=vmem, size = 0xc000, scoped, tag = 'input window, operand 3']
    #allocation10 [shape = 's32[2]{0}', space=sflag, size = 0x8, scoped, tag = 'scoped memory for tpu_custom_call.1']
    #allocation11 [shape = 'u8[24576]{0}', space=vmem, size = 0x6000, scoped, tag = 'input window, operand 4']
    #allocation12 [shape = 'u8[24576]{0}', space=vmem, size = 0x6000, scoped, tag = 'input window, operand 5']
    #allocation13 [shape = 's32[2]{0}', space=sflag, size = 0x8, scoped, tag = 'scoped memory for tpu_custom_call.1']
    #allocation14 [shape = 'u8[1024]{0}', space=vmem, size = 0x400, scoped, tag = 'output window, operand 0']
    %11 = vsyncpa [#allocation4], 0
    %s12 = scalar_lea.sflag [#allocation4], 1
    %13 = vsyncpa %s12, 0
    %14 = vsyncpa [#allocation7], 0
    %s15 = scalar_lea.sflag [#allocation7], 1
    %16 = vsyncpa %s15, 0
    %17 = vsyncpa [#allocation10], 0
    %s18 = scalar_lea.sflag [#allocation10], 1
    %19 = vsyncpa %s18, 0
    %20 = vsyncpa [#allocation13], 0
    %s21 = scalar_lea.sflag [#allocation13], 1
    %22 = vsyncpa %s21, 0
    %23 = vsyncpa [#allocation5], 0
    %s24 = scalar_lea.sflag [#allocation5], 1
    %25 = vsyncpa %s24, 0
    loop: start=0, step=1, limit=4
    $region2: #{tpu_custom_call.1} parent=1 // loop_pre_header
      _
    $region3: #{tpu_custom_call.1} parent=1 // loop_header
      %s27 = sphi 0, %s31
      %p28 = scmp.ge.s32.totalorder %s27, 4
      %s34 = sphi 0, %s46
      %s35 = sphi 0, %s42
      %s36 = sphi 0, %s34
      %s37 = sphi 0, %s35
      %s38 = sphi 0, %s36
      %s39 = sphi 0, %s37
      %s51 = sphi 0, %s53
      %s54 = sphi 0, %s51
      %s55 = sphi 0, %s54
      %s71 = sphi 0, %s55
      %s87 = sphi 0, %s89
      %s90 = sphi 0, %s87
      %s91 = sphi 0, %s90
      %s107 = sphi 0, %s91
      %s123 = sphi 0, %s125
      %s126 = sphi 0, %s123
      %s127 = sphi 0, %s126
      %s143 = sphi 0, %s127
      %s151 = sphi 0, %s153
      %s154 = sphi 0, %s151
      %s155 = sphi 0, %s154
      %s171 = sphi 0, %s155
      %s187 = sphi 0, %s189
      %s190 = sphi 0, %s187
      %s191 = sphi 0, %s190
      %s207 = sphi 0, %s191
      %s223 = sphi 0, %s225
      %s226 = sphi 0, %s223
      %s227 = sphi 0, %s226
      %s243 = sphi 0, %s227
      %s249 = sphi 0, %s251
      %s252 = sphi 0, %s249
      %s253 = sphi 0, %s252
      %s269 = sphi 0, %s253
    $region4: #{tpu_custom_call.1} parent=1 // loop_header_branch
      %30 = sbr.rel (%p28) target = $region8
    $region5: #{tpu_custom_call.1} parent=1 // loop_body
      %s32 = ssub.s32 %s27, 1
      %s33 = ssub.s32 %s27, 2
      %s40 = sadd.s32 1, %s35
      %p41 = scmp.ge.s32.totalorder %s40, 1
      %s42 = scalar_select %p41, 0, %s40
      %s43 = sadd.s32 1, %s34
      %s44 = scalar_select %p41, %s43, %s34
      %p45 = scmp.ge.s32.totalorder %s44, 2
      %s46 = scalar_select %p45, 0, %s44
      %s47 = ssub.s32 %s34, %s46
      %s48 = ssub.s32 %s35, %s42
      %s49 = sor.u32 %s47, %s48
      %p50 = scmp.eq.s32.totalorder %s49, 0
      %s52 = sadd.s32 %s51, 1
      %s53 = scalar_select %p50, %s51, %s52
      %p56 = pneg %p50
      %p57 = scmp.eq.s32.totalorder %s27, 1
      %p58 = por %p56, %p57
      %p59 = scmp.ne.s32.totalorder %s51, %s54
      %p60 = scmp.eq.s32.totalorder %s27, 0
      %p61 = por %p59, %p60
      %p62 = scmp.ne.s32.totalorder %s51, %s54
      %p63 = scmp.eq.s32.totalorder %s32, 1
      %p64 = por %p62, %p63
      %p65 = scmp.ne.s32.totalorder %s54, %s55
      %p66 = scmp.eq.s32.totalorder %s32, 0
      %p67 = por %p65, %p66
      %p68 = scmp.ne.s32.totalorder %s54, %s55
      %p69 = scmp.eq.s32.totalorder %s33, 1
      %p70 = por %p68, %p69
      %p72 = scmp.ne.s32.totalorder %s55, %s71
      %p73 = scmp.eq.s32.totalorder %s33, 0
      %p74 = por %p72, %p73
      %s75 = smul.u32 %s35, 2
      %s76 = ssub.s32 %s75, 1
      %p77 = scmp.gt.s32.totalorder %s76, 0
      %s78 = scalar_select %p77, %s76, 0
      %s79 = smul.u32 %s42, 2
      %s80 = ssub.s32 %s79, 1
      %p81 = scmp.gt.s32.totalorder %s80, 0
      %s82 = scalar_select %p81, %s80, 0
      %s83 = ssub.s32 %s34, %s46
      %s84 = ssub.s32 %s78, %s82
      %s85 = sor.u32 %s83, %s84
      %p86 = scmp.eq.s32.totalorder %s85, 0
      %s88 = sadd.s32 %s87, 1
      %s89 = scalar_select %p86, %s87, %s88
      %p92 = pneg %p86
      %p93 = scmp.eq.s32.totalorder %s27, 1
      %p94 = por %p92, %p93
      %p95 = scmp.ne.s32.totalorder %s87, %s90
      %p96 = scmp.eq.s32.totalorder %s27, 0
      %p97 = por %p95, %p96
      %p98 = scmp.ne.s32.totalorder %s87, %s90
      %p99 = scmp.eq.s32.totalorder %s32, 1
      %p100 = por %p98, %p99
      %p101 = scmp.ne.s32.totalorder %s90, %s91
      %p102 = scmp.eq.s32.totalorder %s32, 0
      %p103 = por %p101, %p102
      %p104 = scmp.ne.s32.totalorder %s90, %s91
      %p105 = scmp.eq.s32.totalorder %s33, 1
      %p106 = por %p104, %p105
      %p108 = scmp.ne.s32.totalorder %s91, %s107
      %p109 = scmp.eq.s32.totalorder %s33, 0
      %p110 = por %p108, %p109
      %s111 = sadd.s32 %s35, 1
      %s112 = smul.u32 %s111, 2
      %p113 = scmp.lt.s32.totalorder %s112, 1
      %s114 = scalar_select %p113, %s112, 1
      %s115 = sadd.s32 %s42, 1
      %s116 = smul.u32 %s115, 2
      %p117 = scmp.lt.s32.totalorder %s116, 1
      %s118 = scalar_select %p117, %s116, 1
      %s119 = ssub.s32 %s34, %s46
      %s120 = ssub.s32 %s114, %s118
      %s121 = sor.u32 %s119, %s120
      %p122 = scmp.eq.s32.totalorder %s121, 0
      %s124 = sadd.s32 %s123, 1
      %s125 = scalar_select %p122, %s123, %s124
      %p128 = pneg %p122
      %p129 = scmp.eq.s32.totalorder %s27, 1
      %p130 = por %p128, %p129
      %p131 = scmp.ne.s32.totalorder %s123, %s126
      %p132 = scmp.eq.s32.totalorder %s27, 0
      %p133 = por %p131, %p132
      %p134 = scmp.ne.s32.totalorder %s123, %s126
      %p135 = scmp.eq.s32.totalorder %s32, 1
      %p136 = por %p134, %p135
      %p137 = scmp.ne.s32.totalorder %s126, %s127
      %p138 = scmp.eq.s32.totalorder %s32, 0
      %p139 = por %p137, %p138
      %p140 = scmp.ne.s32.totalorder %s126, %s127
      %p141 = scmp.eq.s32.totalorder %s33, 1
      %p142 = por %p140, %p141
      %p144 = scmp.ne.s32.totalorder %s127, %s143
      %p145 = scmp.eq.s32.totalorder %s33, 0
      %p146 = por %p144, %p145
      %s147 = ssub.s32 %s34, %s46
      %s148 = ssub.s32 %s35, %s42
      %s149 = sor.u32 %s147, %s148
      %p150 = scmp.eq.s32.totalorder %s149, 0
      %s152 = sadd.s32 %s151, 1
      %s153 = scalar_select %p150, %s151, %s152
      %p156 = pneg %p150
      %p157 = scmp.eq.s32.totalorder %s27, 1
      %p158 = por %p156, %p157
      %p159 = scmp.ne.s32.totalorder %s151, %s154
      %p160 = scmp.eq.s32.totalorder %s27, 0
      %p161 = por %p159, %p160
      %p162 = scmp.ne.s32.totalorder %s151, %s154
      %p163 = scmp.eq.s32.totalorder %s32, 1
      %p164 = por %p162, %p163
      %p165 = scmp.ne.s32.totalorder %s154, %s155
      %p166 = scmp.eq.s32.totalorder %s32, 0
      %p167 = por %p165, %p166
      %p168 = scmp.ne.s32.totalorder %s154, %s155
      %p169 = scmp.eq.s32.totalorder %s33, 1
      %p170 = por %p168, %p169
      %p172 = scmp.ne.s32.totalorder %s155, %s171
      %p173 = scmp.eq.s32.totalorder %s33, 0
      %p174 = por %p172, %p173
      %s175 = smul.u32 %s35, 2
      %s176 = ssub.s32 %s175, 1
      %p177 = scmp.gt.s32.totalorder %s176, 0
      %s178 = scalar_select %p177, %s176, 0
      %s179 = smul.u32 %s42, 2
      %s180 = ssub.s32 %s179, 1
      %p181 = scmp.gt.s32.totalorder %s180, 0
      %s182 = scalar_select %p181, %s180, 0
      %s183 = ssub.s32 %s34, %s46
      %s184 = ssub.s32 %s178, %s182
      %s185 = sor.u32 %s183, %s184
      %p186 = scmp.eq.s32.totalorder %s185, 0
      %s188 = sadd.s32 %s187, 1
      %s189 = scalar_select %p186, %s187, %s188
      %p192 = pneg %p186
      %p193 = scmp.eq.s32.totalorder %s27, 1
      %p194 = por %p192, %p193
      %p195 = scmp.ne.s32.totalorder %s187, %s190
      %p196 = scmp.eq.s32.totalorder %s27, 0
      %p197 = por %p195, %p196
      %p198 = scmp.ne.s32.totalorder %s187, %s190
      %p199 = scmp.eq.s32.totalorder %s32, 1
      %p200 = por %p198, %p199
      %p201 = scmp.ne.s32.totalorder %s190, %s191
      %p202 = scmp.eq.s32.totalorder %s32, 0
      %p203 = por %p201, %p202
      %p204 = scmp.ne.s32.totalorder %s190, %s191
      %p205 = scmp.eq.s32.totalorder %s33, 1
      %p206 = por %p204, %p205
      %p208 = scmp.ne.s32.totalorder %s191, %s207
      %p209 = scmp.eq.s32.totalorder %s33, 0
      %p210 = por %p208, %p209
      %s211 = sadd.s32 %s35, 1
      %s212 = smul.u32 %s211, 2
      %p213 = scmp.lt.s32.totalorder %s212, 1
      %s214 = scalar_select %p213, %s212, 1
      %s215 = sadd.s32 %s42, 1
      %s216 = smul.u32 %s215, 2
      %p217 = scmp.lt.s32.totalorder %s216, 1
      %s218 = scalar_select %p217, %s216, 1
      %s219 = ssub.s32 %s34, %s46
      %s220 = ssub.s32 %s214, %s218
      %s221 = sor.u32 %s219, %s220
      %p222 = scmp.eq.s32.totalorder %s221, 0
      %s224 = sadd.s32 %s223, 1
      %s225 = scalar_select %p222, %s223, %s224
      %p228 = pneg %p222
      %p229 = scmp.eq.s32.totalorder %s27, 1
      %p230 = por %p228, %p229
      %p231 = scmp.ne.s32.totalorder %s223, %s226
      %p232 = scmp.eq.s32.totalorder %s27, 0
      %p233 = por %p231, %p232
      %p234 = scmp.ne.s32.totalorder %s223, %s226
      %p235 = scmp.eq.s32.totalorder %s32, 1
      %p236 = por %p234, %p235
      %p237 = scmp.ne.s32.totalorder %s226, %s227
      %p238 = scmp.eq.s32.totalorder %s32, 0
      %p239 = por %p237, %p238
      %p240 = scmp.ne.s32.totalorder %s226, %s227
      %p241 = scmp.eq.s32.totalorder %s33, 1
      %p242 = por %p240, %p241
      %p244 = scmp.ne.s32.totalorder %s227, %s243
      %p245 = scmp.eq.s32.totalorder %s33, 0
      %p246 = por %p244, %p245
      %s247 = ssub.s32 %s34, %s46
      %p248 = scmp.eq.s32.totalorder %s247, 0
      %s250 = sadd.s32 %s249, 1
      %s251 = scalar_select %p248, %s249, %s250
      %p254 = pneg %p248
      %p255 = scmp.eq.s32.totalorder %s27, 1
      %p256 = por %p254, %p255
      %p257 = scmp.ne.s32.totalorder %s249, %s252
      %p258 = scmp.eq.s32.totalorder %s27, 0
      %p259 = por %p257, %p258
      %p260 = scmp.ne.s32.totalorder %s249, %s252
      %p261 = scmp.eq.s32.totalorder %s32, 1
      %p262 = por %p260, %p261
      %p263 = scmp.ne.s32.totalorder %s252, %s253
      %p264 = scmp.eq.s32.totalorder %s32, 0
      %p265 = por %p263, %p264
      %p266 = scmp.ne.s32.totalorder %s252, %s253
      %p267 = scmp.eq.s32.totalorder %s33, 1
      %p268 = por %p266, %p267
      %p270 = scmp.ne.s32.totalorder %s253, %s269
      %p271 = scmp.eq.s32.totalorder %s33, 0
      %p272 = por %p270, %p271
      %p273 = scmp.le.s32.totalorder 1, %s27
      %p274 = scmp.lt.s32.totalorder %s27, 3
      %p275 = pnand %p273, %p274
      %p276 = pneg %p275
      // Predicated region
      $region9: #{tpu_custom_call.1} parent=5 // pred_check
        _
      $region10: #{tpu_custom_call.1} parent=5 // pred_check_branch
        %278 = sbr.rel (%p275) target = $region12
      $region11: #{tpu_custom_call.1} parent=5 // pred_region
        %s279 = ssub.s32 %s27, 1
      $region12: #{tpu_custom_call.1} parent=5 // pred_fallthru
        _
      %p280 = scmp.lt.s32.totalorder %s27, 2
      // Predicated region
      $region13: #{tpu_custom_call.1} parent=5 // pred_check
        %p281 = pneg %p280
      $region14: #{tpu_custom_call.1} parent=5 // pred_check_branch
        %283 = sbr.rel (%p281) target = $region16
      $region15: #{tpu_custom_call.1} parent=5 // pred_region
        // Predicated region
        $region17: #{tpu_custom_call.1} parent=15 // pred_check
          %p284 = pneg %p61
        $region18: #{tpu_custom_call.1} parent=15 // pred_check_branch
          %286 = sbr.rel (%p284) target = $region20
        $region19: #{tpu_custom_call.1} parent=15 // pred_region
          %s287 = sand.u32 %s51, 1
          %s288 = scalar_lea.sflag [#allocation4], %s287
          %s289 = sand.u32 %s51, 1
          %s290 = smul.addr %s289, 48
          %s291 = scalar_lea.vmem [#allocation3], %s290
          %s292 = smul.u32 2, %s35
          %s294 = ssub.s32 768, 768
          %295 = vsyncadd %s288, %s294
          %s296 = smul.addr %s34, 6
          %s297 = sadd.s32 %s292, %s296
          %s298 = smul.addr %s297, 128
          %s299 = scalar_lea.hbm %s0, %s298
          %s300 = sshll.u32 %s291, 4
          %s301 = int_to_ptr.vmem [resolvable:$true] %s300
          %306 = dma.hbm_to_vmem [thread:$0]  %s299, 768, %s301, %s288, 128, 128, 8
        $region20: #{tpu_custom_call.1} parent=15 // pred_fallthru
          _
        // Predicated region
        $region21: #{tpu_custom_call.1} parent=15 // pred_check
          %p307 = pneg %p97
        $region22: #{tpu_custom_call.1} parent=15 // pred_check_branch
          %309 = sbr.rel (%p307) target = $region24
        $region23: #{tpu_custom_call.1} parent=15 // pred_region
          %s310 = sand.u32 %s27, 1
          %s311 = scalar_lea.sflag [#allocation7], %s310
          %s312 = sand.u32 %s87, 1
          %s313 = smul.addr %s312, 24
          %s314 = scalar_lea.vmem [#allocation6], %s313
          %s315 = smul.u32 %s35, 2
          %s316 = ssub.s32 %s315, 1
          %p317 = scmp.gt.s32.totalorder %s316, 0
          %s318 = scalar_select %p317, %s316, 0
          %s320 = ssub.s32 384, 384
          %321 = vsyncadd %s311, %s320
          %s322 = smul.addr %s34, 6
          %s323 = sadd.s32 %s318, %s322
          %s324 = smul.addr %s323, 128
          %s325 = scalar_lea.hbm %s1, %s324
          %s326 = sshll.u32 %s314, 4
          %s327 = int_to_ptr.vmem [resolvable:$true] %s326
          %332 = dma.hbm_to_vmem [thread:$0]  %s325, 384, %s327, %s311, 256, 128, 8
        $region24: #{tpu_custom_call.1} parent=15 // pred_fallthru
          _
        // Predicated region
        $region25: #{tpu_custom_call.1} parent=15 // pred_check
          %p333 = pneg %p133
        $region26: #{tpu_custom_call.1} parent=15 // pred_check_branch
          %335 = sbr.rel (%p333) target = $region28
        $region27: #{tpu_custom_call.1} parent=15 // pred_region
          %s336 = sand.u32 %s27, 1
          %s337 = scalar_lea.sflag [#allocation7], %s336
          %s338 = sand.u32 %s123, 1
          %s339 = smul.addr %s338, 24
          %s340 = scalar_lea.vmem [#allocation8], %s339
          %s341 = sadd.s32 %s35, 1
          %s342 = smul.u32 %s341, 2
          %p343 = scmp.lt.s32.totalorder %s342, 1
          %s344 = scalar_select %p343, %s342, 1
          %s346 = ssub.s32 384, 384
          %347 = vsyncadd %s337, %s346
          %s348 = smul.addr %s34, 6
          %s349 = sadd.s32 %s344, %s348
          %s350 = smul.addr %s349, 128
          %s351 = scalar_lea.hbm %s2, %s350
          %s352 = sshll.u32 %s340, 4
          %s353 = int_to_ptr.vmem [resolvable:$true] %s352
          %358 = dma.hbm_to_vmem [thread:$0]  %s351, 384, %s353, %s337, 256, 128, 8
        $region28: #{tpu_custom_call.1} parent=15 // pred_fallthru
          _
        // Predicated region
        $region29: #{tpu_custom_call.1} parent=15 // pred_check
          %p359 = pneg %p161
        $region30: #{tpu_custom_call.1} parent=15 // pred_check_branch
          %361 = sbr.rel (%p359) target = $region32
        $region31: #{tpu_custom_call.1} parent=15 // pred_region
          %s362 = sand.u32 %s27, 1
          %s363 = scalar_lea.sflag [#allocation10], %s362
          %s364 = sand.u32 %s151, 1
          %s365 = smul.addr %s364, 48
          %s366 = scalar_lea.vmem [#allocation9], %s365
          %s367 = smul.u32 2, %s35
          %s369 = ssub.s32 768, 768
          %370 = vsyncadd %s363, %s369
          %s371 = smul.addr %s34, 6
          %s372 = sadd.s32 %s367, %s371
          %s373 = smul.addr %s372, 128
          %s374 = scalar_lea.hbm %s3, %s373
          %s375 = sshll.u32 %s366, 4
          %s376 = int_to_ptr.vmem [resolvable:$true] %s375
          %381 = dma.hbm_to_vmem [thread:$0]  %s374, 768, %s376, %s363, 128, 128, 8
        $region32: #{tpu_custom_call.1} parent=15 // pred_fallthru
          _
        // Predicated region
        $region33: #{tpu_custom_call.1} parent=15 // pred_check
          %p382 = pneg %p197
        $region34: #{tpu_custom_call.1} parent=15 // pred_check_branch
          %384 = sbr.rel (%p382) target = $region36
        $region35: #{tpu_custom_call.1} parent=15 // pred_region
          %s385 = sand.u32 %s27, 1
          %s386 = scalar_lea.sflag [#allocation10], %s385
          %s387 = sand.u32 %s187, 1
          %s388 = smul.addr %s387, 24
          %s389 = scalar_lea.vmem [#allocation11], %s388
          %s390 = smul.u32 %s35, 2
          %s391 = ssub.s32 %s390, 1
          %p392 = scmp.gt.s32.totalorder %s391, 0
          %s393 = scalar_select %p392, %s391, 0
          %s395 = ssub.s32 384, 384
          %396 = vsyncadd %s386, %s395
          %s397 = smul.addr %s34, 6
          %s398 = sadd.s32 %s393, %s397
          %s399 = smul.addr %s398, 128
          %s400 = scalar_lea.hbm %s4, %s399
          %s401 = sshll.u32 %s389, 4
          %s402 = int_to_ptr.vmem [resolvable:$true] %s401
          %407 = dma.hbm_to_vmem [thread:$0]  %s400, 384, %s402, %s386, 256, 128, 8
        $region36: #{tpu_custom_call.1} parent=15 // pred_fallthru
          _
        // Predicated region
        $region37: #{tpu_custom_call.1} parent=15 // pred_check
          %p408 = pneg %p233
        $region38: #{tpu_custom_call.1} parent=15 // pred_check_branch
          %410 = sbr.rel (%p408) target = $region40
        $region39: #{tpu_custom_call.1} parent=15 // pred_region
          %s411 = sand.u32 %s223, 1
          %s412 = scalar_lea.sflag [#allocation13], %s411
          %s413 = sand.u32 %s223, 1
          %s414 = smul.addr %s413, 24
          %s415 = scalar_lea.vmem [#allocation12], %s414
          %s416 = sadd.s32 %s35, 1
          %s417 = smul.u32 %s416, 2
          %p418 = scmp.lt.s32.totalorder %s417, 1
          %s419 = scalar_select %p418, %s417, 1
          %s421 = ssub.s32 384, 384
          %422 = vsyncadd %s412, %s421
          %s423 = smul.addr %s34, 6
          %s424 = sadd.s32 %s419, %s423
          %s425 = smul.addr %s424, 128
          %s426 = scalar_lea.hbm %s5, %s425
          %s427 = sshll.u32 %s415, 4
          %s428 = int_to_ptr.vmem [resolvable:$true] %s427
          %433 = dma.hbm_to_vmem [thread:$0]  %s426, 384, %s428, %s412, 256, 128, 8
        $region40: #{tpu_custom_call.1} parent=15 // pred_fallthru
          _
      $region16: #{tpu_custom_call.1} parent=5 // pred_fallthru
        _
      %p434 = scmp.le.s32.totalorder 1, %s27
      %p435 = scmp.lt.s32.totalorder %s27, 3
      %p436 = pnand %p434, %p435
      %p437 = pneg %p436
      // Predicated region
      $region41: #{tpu_custom_call.1} parent=5 // pred_check
        _
      $region42: #{tpu_custom_call.1} parent=5 // pred_check_branch
        %439 = sbr.rel (%p436) target = $region44
      $region43: #{tpu_custom_call.1} parent=5 // pred_region
        %s440 = ssub.s32 %s27, 1
        %s441 = sand.u32 %s54, 1
        %s442 = scalar_lea.sflag [#allocation4], %s441
        %s443 = sand.u32 %s54, 1
        %s444 = smul.addr %s443, 48
        %s445 = scalar_lea.vmem [#allocation3], %s444
        // Predicated region
        $region45: #{tpu_custom_call.1} parent=43 // pred_check
          %p446 = pneg %p67
        $region46: #{tpu_custom_call.1} parent=43 // pred_check_branch
          %448 = sbr.rel (%p446) target = $region48
        $region47: #{tpu_custom_call.1} parent=43 // pred_region
          %449 = dma.done %s442, 768
        $region48: #{tpu_custom_call.1} parent=43 // pred_fallthru
          _
        %s450 = sand.u32 %s32, 1
        %s451 = scalar_lea.sflag [#allocation7], %s450
        %s452 = sand.u32 %s90, 1
        %s453 = smul.addr %s452, 24
        %s454 = scalar_lea.vmem [#allocation6], %s453
        // Predicated region
        $region49: #{tpu_custom_call.1} parent=43 // pred_check
          %p455 = pneg %p103
        $region50: #{tpu_custom_call.1} parent=43 // pred_check_branch
          %457 = sbr.rel (%p455) target = $region52
        $region51: #{tpu_custom_call.1} parent=43 // pred_region
          %458 = dma.done %s451, 384
        $region52: #{tpu_custom_call.1} parent=43 // pred_fallthru
          _
        %s459 = sand.u32 %s32, 1
        %s460 = scalar_lea.sflag [#allocation7], %s459
        %s461 = sand.u32 %s126, 1
        %s462 = smul.addr %s461, 24
        %s463 = scalar_lea.vmem [#allocation8], %s462
        // Predicated region
        $region53: #{tpu_custom_call.1} parent=43 // pred_check
          %p464 = pneg %p139
        $region54: #{tpu_custom_call.1} parent=43 // pred_check_branch
          %466 = sbr.rel (%p464) target = $region56
        $region55: #{tpu_custom_call.1} parent=43 // pred_region
          %467 = dma.done %s460, 384
        $region56: #{tpu_custom_call.1} parent=43 // pred_fallthru
          _
        %s468 = sand.u32 %s32, 1
        %s469 = scalar_lea.sflag [#allocation10], %s468
        %s470 = sand.u32 %s154, 1
        %s471 = smul.addr %s470, 48
        %s472 = scalar_lea.vmem [#allocation9], %s471
        // Predicated region
        $region57: #{tpu_custom_call.1} parent=43 // pred_check
          %p473 = pneg %p167
        $region58: #{tpu_custom_call.1} parent=43 // pred_check_branch
          %475 = sbr.rel (%p473) target = $region60
        $region59: #{tpu_custom_call.1} parent=43 // pred_region
          %476 = dma.done %s469, 768
        $region60: #{tpu_custom_call.1} parent=43 // pred_fallthru
          _
        %s477 = sand.u32 %s32, 1
        %s478 = scalar_lea.sflag [#allocation10], %s477
        %s479 = sand.u32 %s190, 1
        %s480 = smul.addr %s479, 24
        %s481 = scalar_lea.vmem [#allocation11], %s480
        // Predicated region
        $region61: #{tpu_custom_call.1} parent=43 // pred_check
          %p482 = pneg %p203
        $region62: #{tpu_custom_call.1} parent=43 // pred_check_branch
          %484 = sbr.rel (%p482) target = $region64
        $region63: #{tpu_custom_call.1} parent=43 // pred_region
          %485 = dma.done %s478, 384
        $region64: #{tpu_custom_call.1} parent=43 // pred_fallthru
          _
        %s486 = sand.u32 %s226, 1
        %s487 = scalar_lea.sflag [#allocation13], %s486
        %s488 = sand.u32 %s226, 1
        %s489 = smul.addr %s488, 24
        %s490 = scalar_lea.vmem [#allocation12], %s489
        // Predicated region
        $region65: #{tpu_custom_call.1} parent=43 // pred_check
          %p491 = pneg %p239
        $region66: #{tpu_custom_call.1} parent=43 // pred_check_branch
          %493 = sbr.rel (%p491) target = $region68
        $region67: #{tpu_custom_call.1} parent=43 // pred_region
          %494 = dma.done %s487, 384
        $region68: #{tpu_custom_call.1} parent=43 // pred_fallthru
          _
        %s495 = sand.u32 %s54, 1
        %s496 = scalar_lea.sflag [#allocation4], %s495
        %s497 = sand.u32 %s54, 1
        %s498 = smul.addr %s497, 48
        %s499 = scalar_lea.vmem [#allocation3], %s498
        %p500 = pneg %p67
        %p501 = pneg %p64
        %s502 = sand.u32 %s32, 1
        %s503 = scalar_lea.sflag [#allocation7], %s502
        %s504 = sand.u32 %s90, 1
        %s505 = smul.addr %s504, 24
        %s506 = scalar_lea.vmem [#allocation6], %s505
        %p507 = pneg %p103
        %p508 = pneg %p100
        %s509 = sand.u32 %s32, 1
        %s510 = scalar_lea.sflag [#allocation7], %s509
        %s511 = sand.u32 %s126, 1
        %s512 = smul.addr %s511, 24
        %s513 = scalar_lea.vmem [#allocation8], %s512
        %p514 = pneg %p139
        %p515 = pneg %p136
        %s516 = sand.u32 %s32, 1
        %s517 = scalar_lea.sflag [#allocation10], %s516
        %s518 = sand.u32 %s154, 1
        %s519 = smul.addr %s518, 48
        %s520 = scalar_lea.vmem [#allocation9], %s519
        %p521 = pneg %p167
        %p522 = pneg %p164
        %s523 = sand.u32 %s32, 1
        %s524 = scalar_lea.sflag [#allocation10], %s523
        %s525 = sand.u32 %s190, 1
        %s526 = smul.addr %s525, 24
        %s527 = scalar_lea.vmem [#allocation11], %s526
        %p528 = pneg %p203
        %p529 = pneg %p200
        %s530 = sand.u32 %s226, 1
        %s531 = scalar_lea.sflag [#allocation13], %s530
        %s532 = sand.u32 %s226, 1
        %s533 = smul.addr %s532, 24
        %s534 = scalar_lea.vmem [#allocation12], %s533
        %p535 = pneg %p239
        %p536 = pneg %p236
        %p537 = pneg %p265
        %p538 = pneg %p262
        %s539 = sand.u32 %s252, 1
        %s540 = scalar_lea.sflag [#allocation5], %s539
        %s541 = sand.u32 %s252, 1
        %s542 = scalar_lea.vmem [#allocation14], %s541
        %s543 = smul.u32 2, %s37
        %s544 = smul.u32 %s37, 2
        %s545 = ssub.s32 %s544, 1
        %p546 = scmp.gt.s32.totalorder %s545, 0
        %s547 = scalar_select %p546, %s545, 0
        %s548 = sadd.s32 %s37, 1
        %s549 = smul.u32 %s548, 2
        %p550 = scmp.lt.s32.totalorder %s549, 1
        %s551 = scalar_select %p550, %s549, 1
        %s552 = smul.u32 2, %s37
        %s553 = smul.u32 %s37, 2
        %s554 = ssub.s32 %s553, 1
        %p555 = scmp.gt.s32.totalorder %s554, 0
        %s556 = scalar_select %p555, %s554, 0
        %s557 = sadd.s32 %s37, 1
        %s558 = smul.u32 %s557, 2
        %p559 = scmp.lt.s32.totalorder %s558, 1
        %s560 = scalar_select %p559, %s558, 1
        %p561 = scmp.eq.s32.totalorder %s37, 0
        // Predicated region
        $region69: #{tpu_custom_call.1} parent=43 // pred_check
          %p562 = pneg %p561
        $region70: #{tpu_custom_call.1} parent=43 // pred_check_branch
          %564 = sbr.rel (%p562) target = $region72
        $region71: #{tpu_custom_call.1} parent=43 // pred_region
          %vm565 = vcmask 130048
          %566 = vst.msk [vmem:[#allocation2] sm:$0xff] %vm565, 0.0
          %567 = vst.msk [vmem:[#allocation2 + $0x8] sm:$0xff] %vm565, 0.0
        $region72: #{tpu_custom_call.1} parent=43 // pred_fallthru
          _
        %p568 = scmp.gt.s32.totalorder %s37, 0
        %s569 = scalar_select %p568, 1, 0
        %s570 = scvt.s32.f32 %s569
        %p571 = scmp.lt.s32.totalorder %s37, 0
        %s572 = scalar_select %p571, 1, 0
        %s573 = scvt.s32.f32 %s572
        %v574 = vld [vmem:[%s445] sm:$0xff]
        %v575 = vld [vmem:[%s445 + $0x8] sm:$0xff]
        %v576 = vmul.f32 %v574, 0.25678906
        %v577 = vmul.f32 %v575, 0.25678906
        %s578 = scalar_lea.vmem %s445, 16 [#allocation3]
        %v579 = vld [vmem:[%s578] sm:$0xff]
        %v580 = vld [vmem:[%s578 + $0x8] sm:$0xff]
        %v581 = vmul.f32 %v579, 0.50412893
        %v582 = vmul.f32 %v580, 0.50412893
        %v583 = vadd.f32 %v576, %v581
        %v584 = vadd.f32 %v577, %v582
        %s585 = scalar_lea.vmem %s445, 32 [#allocation3]
        %v586 = vld [vmem:[%s585] sm:$0xff]
        %v587 = vld [vmem:[%s585 + $0x8] sm:$0xff]
        %v588 = vmul.f32 %v586, 0.09790625
        %v589 = vmul.f32 %v587, 0.09790625
        %v590 = vadd.f32 %v583, %v588
        %v591 = vadd.f32 %v584, %v589
        %v592 = vld [vmem:[%s454] sm:$0xff]
        %v593 = vmul.f32 %v592, 0.25678906
        %s594 = scalar_lea.vmem %s454, 8 [#allocation6]
        %v595 = vld [vmem:[%s594] sm:$0xff]
        %v596 = vmul.f32 %v595, 0.50412893
        %v597 = vadd.f32 %v593, %v596
        %s598 = scalar_lea.vmem %s454, 16 [#allocation6]
        %v599 = vld [vmem:[%s598] sm:$0xff]
        %v600 = vmul.f32 %v599, 0.09790625
        %v601 = vadd.f32 %v597, %v600
        %v602 = vstv %s570
        %v603 = vmul.f32 %v601, %v602
        %v604 = vld [vmem:[%s463] sm:$0xff]
        %v605 = vmul.f32 %v604, 0.25678906
        %s606 = scalar_lea.vmem %s463, 8 [#allocation8]
        %v607 = vld [vmem:[%s606] sm:$0xff]
        %v608 = vmul.f32 %v607, 0.50412893
        %v609 = vadd.f32 %v605, %v608
        %s610 = scalar_lea.vmem %s463, 16 [#allocation8]
        %v611 = vld [vmem:[%s610] sm:$0xff]
        %v612 = vmul.f32 %v611, 0.09790625
        %v613 = vadd.f32 %v609, %v612
        %v614 = vstv %s573
        %v615 = vmul.f32 %v613, %v614
        %v616 = vlaneseq
        %v617 = vshrl.u32 %v616, 7
        %v618 = vadd.s32 %v617, 8
        %v619 = vrot.slane %v590, 1
        %v620 = vrot.slane %v591, 1
        %vm621 = vcmp.lt.s32.totalorder %v617, 7
        %v622 = vsel %vm621, %v619, %v620
        %v623 = vsel %vm621, %v620, %v619
        %v624 = vrot.slane %v590, 7
        %v625 = vrot.slane %v591, 7
        %vm626 = vcmp.lt.s32.totalorder %v617, 1
        %v627 = vsel %vm626, %v624, %v625
        %v628 = vsel %vm626, %v625, %v624
        %v629 = vsub.f32 %v622, %v628
        %v630 = vsub.f32 %v623, %v627
        %vm631 = vcmp.eq.s32.totalorder %v617, 0
        %vm632 = vcmp.eq.s32.totalorder %v618, 0
        %v634 = vrot.slane %v603, 6
        %v636 = vsub.f32 %v590, %v634
        %v637 = vsel %vm631, 1, 0
        %v638 = vsel %vm632, 1, 0
        %vm639 = vcmp.eq.s32.totalorder %v637, 1
        %vm640 = vcmp.eq.s32.totalorder %v638, 1
        %v641 = vlaneseq
        %v642 = vshrl.u32 %v641, 7
        %v643 = vsub.s32 1, %v642
        %v644 = vrot.slane %v636, %v643
        %v645 = vsel %vm639, %v644, %v629
        %v646 = vsel %vm640, %v644, %v630
        %vm647 = vcmp.eq.s32.totalorder %v617, 15
        %vm648 = vcmp.eq.s32.totalorder %v618, 15
        %v650 = vrot.slane %v591, 6
        %v652 = vsub.f32 %v615, %v650
        %v653 = vsel %vm647, 1, 0
        %v654 = vsel %vm648, 1, 0
        %vm655 = vcmp.eq.s32.totalorder %v653, 1
        %vm656 = vcmp.eq.s32.totalorder %v654, 1
        %v657 = vlaneseq
        %v658 = vshrl.u32 %v657, 7
        %v659 = vsub.s32 0, %v658
        %v660 = vrot.slane %v652, %v659
        %v661 = vsel %vm655, %v660, %v645
        %v662 = vsel %vm656, %v660, %v646
        %664 = vrot.lane.b32.xlu0 %v590, 127
        %v665 = vpop.permute.xlu0 %664
        %666 = vrot.lane.b32.xlu0 %v591, 127
        %v667 = vpop.permute.xlu0 %666
        %vm670 = vcmask 121856
        %v671 = vsel %vm670, %v665, 0.0
        %v672 = vsel %vm670, %v667, 0.0
        %673 = vrot.lane.b32.xlu0 %v590, 1
        %v674 = vpop.permute.xlu0 %673
        %675 = vrot.lane.b32.xlu0 %v591, 1
        %v676 = vpop.permute.xlu0 %675
        %vm679 = vcmask 7168
        %v680 = vsel %vm679, 0.0, %v674
        %v681 = vsel %vm679, 0.0, %v676
        %v682 = vsub.f32 %v671, %v680
        %v683 = vsub.f32 %v672, %v681
        %v684 = vmul.f32 %v661, %v661
        %v685 = vmul.f32 %v662, %v662
        %v686 = vmul.f32 %v682, %v682
        %v687 = vmul.f32 %v683, %v683
        %v688 = vadd.f32 %v684, %v686
        %v689 = vadd.f32 %v685, %v687
        %v690 = vadd.f32 %v688, 1e-06
        %v691 = vadd.f32 %v689, 1e-06
        %v692 = vrsqrt.pop %v690
        %v693 = vmul.f32 %v690, %v692
        %vm694 = vcmp.eq.f32.partialorder %v690, inf
        %v695 = vsel %vm694, %v690, %v693
        %vm696 = vcmp.eq.f32.partialorder %v690, 0.0
        %v697 = vand.u32 %v690, 2147483648
        %v698 = vsel %vm696, %v697, %v695
        %v699 = vrsqrt.pop %v691
        %v700 = vmul.f32 %v691, %v699
        %vm701 = vcmp.eq.f32.partialorder %v691, inf
        %v702 = vsel %vm701, %v691, %v700
        %vm703 = vcmp.eq.f32.partialorder %v691, 0.0
        %v704 = vand.u32 %v691, 2147483648
        %v705 = vsel %vm703, %v704, %v702
        %v706 = vld [vmem:[%s472] sm:$0xff]
        %v707 = vld [vmem:[%s472 + $0x8] sm:$0xff]
        %v708 = vmul.f32 %v706, 0.25678906
        %v709 = vmul.f32 %v707, 0.25678906
        %s710 = scalar_lea.vmem %s472, 16 [#allocation9]
        %v711 = vld [vmem:[%s710] sm:$0xff]
        %v712 = vld [vmem:[%s710 + $0x8] sm:$0xff]
        %v713 = vmul.f32 %v711, 0.50412893
        %v714 = vmul.f32 %v712, 0.50412893
        %v715 = vadd.f32 %v708, %v713
        %v716 = vadd.f32 %v709, %v714
        %s717 = scalar_lea.vmem %s472, 32 [#allocation9]
        %v718 = vld [vmem:[%s717] sm:$0xff]
        %v719 = vld [vmem:[%s717 + $0x8] sm:$0xff]
        %v720 = vmul.f32 %v718, 0.09790625
        %v721 = vmul.f32 %v719, 0.09790625
        %v722 = vadd.f32 %v715, %v720
        %v723 = vadd.f32 %v716, %v721
        %v724 = vld [vmem:[%s481] sm:$0xff]
        %v725 = vmul.f32 %v724, 0.25678906
        %s726 = scalar_lea.vmem %s481, 8 [#allocation11]
        %v727 = vld [vmem:[%s726] sm:$0xff]
        %v728 = vmul.f32 %v727, 0.50412893
        %v729 = vadd.f32 %v725, %v728
        %s730 = scalar_lea.vmem %s481, 16 [#allocation11]
        %v731 = vld [vmem:[%s730] sm:$0xff]
        %v732 = vmul.f32 %v731, 0.09790625
        %v733 = vadd.f32 %v729, %v732
        %v734 = vmul.f32 %v733, %v602
        %v735 = vld [vmem:[%s490] sm:$0xff]
        %v736 = vmul.f32 %v735, 0.25678906
        %s737 = scalar_lea.vmem %s490, 8 [#allocation12]
        %v738 = vld [vmem:[%s737] sm:$0xff]
        %v739 = vmul.f32 %v738, 0.50412893
        %v740 = vadd.f32 %v736, %v739
        %s741 = scalar_lea.vmem %s490, 16 [#allocation12]
        %v742 = vld [vmem:[%s741] sm:$0xff]
        %v743 = vmul.f32 %v742, 0.09790625
        %v744 = vadd.f32 %v740, %v743
        %v745 = vmul.f32 %v744, %v614
        %v746 = vrot.slane %v722, 1
        %v747 = vrot.slane %v723, 1
        %v748 = vsel %vm621, %v746, %v747
        %v749 = vsel %vm621, %v747, %v746
        %v750 = vrot.slane %v722, 7
        %v751 = vrot.slane %v723, 7
        %v752 = vsel %vm626, %v750, %v751
        %v753 = vsel %vm626, %v751, %v750
        %v754 = vsub.f32 %v748, %v753
        %v755 = vsub.f32 %v749, %v752
        %v757 = vrot.slane %v734, 6
        %v759 = vsub.f32 %v722, %v757
        %v760 = vlaneseq
        %v761 = vshrl.u32 %v760, 7
        %v762 = vsub.s32 1, %v761
        %v763 = vrot.slane %v759, %v762
        %v764 = vsel %vm639, %v763, %v754
        %v765 = vsel %vm640, %v763, %v755
        %v767 = vrot.slane %v723, 6
        %v769 = vsub.f32 %v745, %v767
        %v770 = vlaneseq
        %v771 = vshrl.u32 %v770, 7
        %v772 = vsub.s32 0, %v771
        %v773 = vrot.slane %v769, %v772
        %v774 = vsel %vm655, %v773, %v764
        %v775 = vsel %vm656, %v773, %v765
        %777 = vrot.lane.b32.xlu0 %v722, 127
        %v778 = vpop.permute.xlu0 %777
        %779 = vrot.lane.b32.xlu0 %v723, 127
        %v780 = vpop.permute.xlu0 %779
        %v783 = vsel %vm670, %v778, 0.0
        %v784 = vsel %vm670, %v780, 0.0
        %785 = vrot.lane.b32.xlu0 %v722, 1
        %v786 = vpop.permute.xlu0 %785
        %787 = vrot.lane.b32.xlu0 %v723, 1
        %v788 = vpop.permute.xlu0 %787
        %v791 = vsel %vm679, 0.0, %v786
        %v792 = vsel %vm679, 0.0, %v788
        %v793 = vsub.f32 %v783, %v791
        %v794 = vsub.f32 %v784, %v792
        %v795 = vmul.f32 %v774, %v774
        %v796 = vmul.f32 %v775, %v775
        %v797 = vmul.f32 %v793, %v793
        %v798 = vmul.f32 %v794, %v794
        %v799 = vadd.f32 %v795, %v797
        %v800 = vadd.f32 %v796, %v798
        %v801 = vadd.f32 %v799, 1e-06
        %v802 = vadd.f32 %v800, 1e-06
        %v803 = vrsqrt.pop %v801
        %v804 = vmul.f32 %v801, %v803
        %vm805 = vcmp.eq.f32.partialorder %v801, inf
        %v806 = vsel %vm805, %v801, %v804
        %vm807 = vcmp.eq.f32.partialorder %v801, 0.0
        %v808 = vand.u32 %v801, 2147483648
        %v809 = vsel %vm807, %v808, %v806
        %v810 = vrsqrt.pop %v802
        %v811 = vmul.f32 %v802, %v810
        %vm812 = vcmp.eq.f32.partialorder %v802, inf
        %v813 = vsel %vm812, %v802, %v811
        %vm814 = vcmp.eq.f32.partialorder %v802, 0.0
        %v815 = vand.u32 %v802, 2147483648
        %v816 = vsel %vm814, %v815, %v813
        %v817 = vld [vmem:[#allocation2] sm:$0xff]
        %v818 = vld [vmem:[#allocation2 + $0x8] sm:$0xff]
        %v819 = vsub.f32 %v698, %v809
        %v820 = vsub.f32 %v705, %v816
        %v821 = vand.u32 2147483647, %v819
        %v822 = vand.u32 2147483647, %v820
        %v823 = vadd.f32 %v817, %v821
        %v824 = vadd.f32 %v818, %v822
        %vm825 = vcmask 130048
        %826 = vst.msk [vmem:[#allocation2] sm:$0xff] %vm825, %v823
        %827 = vst.msk [vmem:[#allocation2 + $0x8] sm:$0xff] %vm825, %v824
        // Predicated region
        $region73: #{tpu_custom_call.1} parent=43 // pred_check
          %p828 = pneg %p561
        $region74: #{tpu_custom_call.1} parent=43 // pred_check_branch
          %830 = sbr.rel (%p828) target = $region76
        $region75: #{tpu_custom_call.1} parent=43 // pred_region
          %v831 = vld [vmem:[#allocation2] sm:$0xff]
          %v832 = vld [vmem:[#allocation2 + $0x8] sm:$0xff]
          %v833 = vsel %vm825, %v831, 0.0
          %v834 = vsel %vm825, %v832, 0.0
          %v835 = vadd.f32 %v833, %v834
          %v836 = vrot.slane %v835, 4
          %v837 = vadd.f32 %v835, %v836
          %v838 = vrot.slane %v837, 2
          %v839 = vadd.f32 %v837, %v838
          %v840 = vrot.slane %v839, 1
          %v841 = vadd.f32 %v839, %v840
          %vm842 = vcmask 122880
          %843 = vst.msk [vmem:[%s542] sm:$0x1] %vm842, %v841
        $region76: #{tpu_custom_call.1} parent=43 // pred_fallthru
          _
        %s844 = sand.u32 %s252, 1
        %s845 = scalar_lea.sflag [#allocation5], %s844
        %s846 = sand.u32 %s252, 1
        %s847 = scalar_lea.vmem [#allocation14], %s846
        // Predicated region
        $region77: #{tpu_custom_call.1} parent=43 // pred_check
          %p848 = pneg %p262
        $region78: #{tpu_custom_call.1} parent=43 // pred_check_branch
          %850 = sbr.rel (%p848) target = $region80
        $region79: #{tpu_custom_call.1} parent=43 // pred_region
          %s852 = ssub.s32 16, 16
          %853 = vsyncadd %s845, %s852
          %s854 = smul.addr %s36, 16
          %s855 = scalar_lea.hbm %s6, %s854
          %s857 = sshll.u32 %s847, 4
          %s858 = int_to_ptr.vmem [resolvable:$true] %s857
          %860 = dma.vmem_to_hbm [thread:$0]  %s858, 16, %s855, %s845
        $region80: #{tpu_custom_call.1} parent=43 // pred_fallthru
          _
      $region44: #{tpu_custom_call.1} parent=5 // pred_fallthru
        _
      %p861 = scmp.le.s32.totalorder 2, %s27
      // Predicated region
      $region81: #{tpu_custom_call.1} parent=5 // pred_check
        %p862 = pneg %p861
      $region82: #{tpu_custom_call.1} parent=5 // pred_check_branch
        %864 = sbr.rel (%p862) target = $region84
      $region83: #{tpu_custom_call.1} parent=5 // pred_region
        %s865 = ssub.s32 %s27, 2
        // Predicated region
        $region85: #{tpu_custom_call.1} parent=83 // pred_check
          %p866 = pneg %p268
        $region86: #{tpu_custom_call.1} parent=83 // pred_check_branch
          %868 = sbr.rel (%p866) target = $region88
        $region87: #{tpu_custom_call.1} parent=83 // pred_region
          %s869 = sand.u32 %s253, 1
          %s870 = scalar_lea.sflag [#allocation5], %s869
          %s871 = sand.u32 %s253, 1
          %s872 = scalar_lea.vmem [#allocation14], %s871
          %873 = dma.done %s870, 16
        $region88: #{tpu_custom_call.1} parent=83 // pred_fallthru
          _
      $region84: #{tpu_custom_call.1} parent=5 // pred_fallthru
        _
    $region6: #{tpu_custom_call.1} parent=1 // loop_footer
      %s31 = sadd.s32 1, %s27
    $region7: #{tpu_custom_call.1} parent=1 // loop_footer_branch
      %26 = sbr.rel target = $region3
    $region8: #{tpu_custom_call.1} parent=1 // loop_exit
      _
    %874 = vsyncpa [#allocation4], 1
    %s875 = scalar_lea.sflag [#allocation4], 1
    %876 = vsyncpa %s875, 1
    %877 = vsyncpa [#allocation7], 1
    %s878 = scalar_lea.sflag [#allocation7], 1
    %879 = vsyncpa %s878, 1
    %880 = vsyncpa [#allocation10], 1
    %s881 = scalar_lea.sflag [#allocation10], 1
    %882 = vsyncpa %s881, 1
    %883 = vsyncpa [#allocation13], 1
    %s884 = scalar_lea.sflag [#allocation13], 1
    %885 = vsyncpa %s884, 1
    %886 = vsyncpa [#allocation5], 1
    %s887 = scalar_lea.sflag [#allocation5], 1
    %888 = vsyncpa %s887, 1

</llo_original>
